<compile_context>
chip_gen: v5e
topology: v5e:2x2
jax: 0.10.0
libtpu: 0.0.40
codegen_flags: <defaults>
</compile_context>

<pallas_src>
import jax
import jax.numpy as jnp
from jax.experimental import pallas as pl
from jax.experimental.pallas import tpu as pltpu


# ---------------------------------------------------------------------------
# Single pass: conv matmul (BN scale pre-folded) + shift + LeakyReLU,
# lane-dense output stores.
# ---------------------------------------------------------------------------
def _convt_apply_kernel(w_ref, x_ref, shift_ref, o_ref):
    # w_ref    : (4*Cout, 4*Cin)  packed polyphase weights, BN scale folded in
    # x_ref    : (4*Cin, TM)      shifted-im2col input tile (flat spatial on lanes)
    # shift_ref: (4*Cout, 1)      folded BN shift per output row
    # o_ref    : (4*Cout, TM)     lane-dense output tile
    z = jnp.dot(w_ref[...], x_ref[...], preferred_element_type=jnp.float32)
    y = z + shift_ref[...]
    o_ref[...] = jnp.maximum(y, 0.01 * y).astype(o_ref.dtype)


# ---------------------------------------------------------------------------
# Wrapper: NCHW in / NCHW out
# ---------------------------------------------------------------------------
def convt_forward(x_nchw, weight, bias, gamma, beta, *, tile_m=2048):
    """ConvTranspose2d(k=3, s=2, p=1, op=1) + BatchNorm2d(batch stats) + LeakyReLU(0.01).

    x_nchw : (N, Cin, H, W)        weight : (Cin, Cout, 3, 3)  (PyTorch ConvTranspose2d layout)
    bias   : (Cout,)  (cancels exactly under train-mode BN)    gamma, beta : (Cout,)
    returns (N, Cout, 2H, 2W) float32
    """
    N, Cin, H, W = x_nchw.shape
    Cout = weight.shape[1]
    assert weight.shape[0] == Cin and weight.shape[2] == 3 and weight.shape[3] == 3, \
        "specialised for ksize=3, stride=2"
    Ho, Wo = 2 * H, 2 * W
    R = 4 * Cout   # 4 phases x Cout output rows
    Kc = 4 * Cin   # 4 shifts x Cin contraction dim

    x = x_nchw.astype(jnp.float32)

    # ---- 4-way shifted im2col (cheap XLA glue on the small input) ------------
    xp = jnp.pad(x, ((0, 0), (0, 0), (0, 1), (0, 1)))          # zero row/col at high edge
    shifts = ((0, 0), (0, 1), (1, 0), (1, 1))
    xcol = jnp.stack([xp[:, :, dh:dh + H, dw:dw + W] for dh, dw in shifts], axis=0)
    # (4, N, Cin, H, W) -> (4, Cin, N, H, W) -> (4*Cin, N*H*W)
    xcol = xcol.transpose(0, 2, 1, 3, 4).reshape(Kc, N * H * W)
    M = N * H * W

    # ---- pack polyphase weights: row = phase*Cout + co, col = shift*Cin + ci --
    # output (2i+rh, 2j+rw) pulls input (i+dh, j+dw) through tap (kh, kw) = (rh+1-2dh, rw+1-2dw)
    wt = weight.astype(jnp.float32)                             # (Cin, Cout, 3, 3)
    w_all = jnp.zeros((R, Kc), jnp.float32)
    for rh in range(2):
        for rw in range(2):
            p = 2 * rh + rw
            for dh in range(2):
                for dw in range(2):
                    kh, kw = rh + 1 - 2 * dh, rw + 1 - 2 * dw
                    if 0 <= kh < 3 and 0 <= kw < 3:
                        s = 2 * dh + dw
                        w_all = w_all.at[p * Cout:(p + 1) * Cout,
                                         s * Cin:(s + 1) * Cin].set(wt[:, :, kh, kw].T)

    # ---- global batch stats via Gram identities (plain XLA, no Pallas pass) --
    # z = w_all @ xcol is the bias-free conv output; its per-channel sums are
    #   sum_m z[r,m]   = w_r . rowsum(xcol)
    #   sum_m z[r,m]^2 = w_r^T (xcol xcol^T) w_r
    cnt = jnp.float32(N * Ho * Wo)                              # = 4 * M
    s_vec = jnp.sum(xcol, axis=1)                               # (Kc,)
    gram = jnp.dot(xcol, xcol.T, preferred_element_type=jnp.float32)   # (Kc, Kc)
    row_sum = w_all @ s_vec                                     # (R,)
    row_sq = jnp.sum((w_all @ gram) * w_all, axis=1)            # (R,)
    ch_sum = row_sum.reshape(4, Cout).sum(axis=0)
    ch_sq = row_sq.reshape(4, Cout).sum(axis=0)
    mean = ch_sum / cnt
    var = jnp.maximum(ch_sq / cnt - mean * mean, 0.0)
    inv = jax.lax.rsqrt(var + 1e-5)
    scale_c = gamma.astype(jnp.float32) * inv
    # NOTE: the ConvTranspose2d bias cancels exactly under train-mode BatchNorm
    # (it shifts the activation and its batch mean identically), so it is not
    # added; `bias` is kept only for API fidelity.
    shift_c = beta.astype(jnp.float32) - mean * scale_c

    w_scaled = w_all * jnp.tile(scale_c, 4).reshape(R, 1)       # fold BN scale into weights
    shift_row = jnp.tile(shift_c, 4).reshape(R, 1)

    # ---- tile selection: big lane tiles, but keep >= 2 grid steps when M allows
    tile_m = max(128, (int(tile_m) // 128) * 128)
    M128 = ((M + 127) // 128) * 128
    tile_cap = max(128, (M128 // 256) * 128)                    # <= ~half of M (v7x: 2 TCs)
    tile_m = min(tile_m, tile_cap)
    M_pad = ((M + tile_m - 1) // tile_m) * tile_m
    if M_pad != M:
        xcol = jnp.pad(xcol, ((0, 0), (0, M_pad - M)))          # padded cols sliced off below
    T = M_pad // tile_m

    # ---- single Pallas pass: conv matmul + fused BN shift + LeakyReLU --------
    y_flat = pl.pallas_call(
        _convt_apply_kernel,
        grid=(T,),
        in_specs=[pl.BlockSpec((R, Kc), lambda i: (0, 0)),
                  pl.BlockSpec((Kc, tile_m), lambda i: (0, i)),
                  pl.BlockSpec((R, 1), lambda i: (0, 0))],
        out_specs=pl.BlockSpec((R, tile_m), lambda i: (0, i)),
        out_shape=jax.ShapeDtypeStruct((R, M_pad), jnp.float32),
        compiler_params=pltpu.CompilerParams(dimension_semantics=("parallel",)),
    )(w_scaled, xcol, shift_row)

    # ---- de-interleave the 4 phases into NCHW (one XLA transpose; see TODO) --
    y = y_flat[:, :M].reshape(2, 2, Cout, N, H, W)
    y = y.transpose(3, 2, 4, 0, 5, 1).reshape(N, Cout, Ho, Wo)
    return y


# ---------------------------------------------------------------------------
# Pure-JAX reference (semantics of the PyTorch module in training mode)
# ---------------------------------------------------------------------------
def convt_reference(x_nchw, weight, bias, gamma, beta):
    wf = jnp.transpose(weight[:, :, ::-1, ::-1], (1, 0, 2, 3))
    y = jax.lax.conv_general_dilated(
        x_nchw.astype(jnp.float32), wf.astype(jnp.float32),
        window_strides=(1, 1),
        padding=((1, 2), (1, 2)),
        lhs_dilation=(2, 2),
        dimension_numbers=('NCHW', 'OIHW', 'NCHW'))
    y = y + bias[None, :, None, None]
    m = jnp.mean(y, axis=(0, 2, 3), keepdims=True)
    v = jnp.mean((y - m) ** 2, axis=(0, 2, 3), keepdims=True)
    y = (y - m) / jnp.sqrt(v + 1e-5)
    y = y * gamma[None, :, None, None] + beta[None, :, None, None]
    return jnp.where(y > 0, y, 0.01 * y)


if __name__ == "__main__":
    key = jax.random.PRNGKey(0)
    k1, k2, k3, k4, k5 = jax.random.split(key, 5)

    N, Cin, H, W = 2, 4, 16, 16
    Cout, K = 32, 3

    x = jax.random.normal(k1, (N, Cin, H, W), jnp.float32)
    weight = 0.1 * jax.random.normal(k2, (Cin, Cout, K, K), jnp.float32)  # ConvTranspose2d layout
    bias = 0.1 * jax.random.normal(k3, (Cout,), jnp.float32)
    gamma = 1.0 + 0.1 * jax.random.normal(k4, (Cout,), jnp.float32)       # BatchNorm2d weight
    beta = 0.1 * jax.random.normal(k5, (Cout,), jnp.float32)              # BatchNorm2d bias

    out = jax.jit(convt_forward)(x, weight, bias, gamma, beta)
    out = jax.block_until_ready(out)

    ref = convt_reference(x, weight, bias, gamma, beta)
    assert out.shape == (N, Cout, 2 * H, 2 * W), out.shape
    assert jnp.allclose(out, ref, atol=2e-3, rtol=2e-3), float(jnp.max(jnp.abs(out - ref)))

    print("KERNEL_OK")
</pallas_src>

<mosaic_0001>
module attributes {stable_mosaic.version = 11 : i64} {
  func.func @_convt_apply_kernel(%arg0: i32, %arg1: memref<128x16xf32, #tpu.memory_space<vmem>>, %arg2: memref<16x256xf32, #tpu.memory_space<vmem>>, %arg3: memref<128x1xf32, #tpu.memory_space<vmem>>, %arg4: memref<128x256xf32, #tpu.memory_space<vmem>>) attributes {dimension_semantics = [#tpu.dimension_semantics<parallel>], iteration_bounds = array<i64: 2>, scalar_prefetch = 0 : i64, scratch_operands = 0 : i64, tpu.core_type = #tpu.core_type<tc>, window_params = [{pipeline_mode = #tpu.pipeline_mode<synchronous>, transform_indices = @transform_0, window_bounds = array<i64: 128, 16>}, {transform_indices = @transform_1, window_bounds = array<i64: 16, 256>}, {pipeline_mode = #tpu.pipeline_mode<synchronous>, transform_indices = @transform_2, window_bounds = array<i64: 128, 1>}, {transform_indices = @transform_3, window_bounds = array<i64: 128, 256>}]} {
    %c0 = arith.constant 0 : index
    %c0_0 = arith.constant 0 : index
    %0 = vector.load %arg1[%c0, %c0_0] : memref<128x16xf32, #tpu.memory_space<vmem>>, vector<128x16xf32>
    %c0_1 = arith.constant 0 : index
    %c0_2 = arith.constant 0 : index
    %1 = vector.load %arg2[%c0_1, %c0_2] : memref<16x256xf32, #tpu.memory_space<vmem>>, vector<16x256xf32>
    %cst = arith.constant dense<0.000000e+00> : vector<128x256xf32>
    %2 = tpu.matmul %0, %1, %cst {dimension_numbers = #tpu.dot_dimension_numbers<[1], [0], [0], [1], [0, 0, 1, 1], [], []>} : vector<128x16xf32>, vector<16x256xf32>, vector<128x256xf32> -> vector<128x256xf32>
    %c0_3 = arith.constant 0 : index
    %c0_4 = arith.constant 0 : index
    %3 = vector.load %arg3[%c0_3, %c0_4] : memref<128x1xf32, #tpu.memory_space<vmem>>, vector<128x1xf32>
    %4 = vector.broadcast %3 : vector<128x1xf32> to vector<128x256xf32>
    %5 = arith.addf %2, %4 : vector<128x256xf32>
    %cst_5 = arith.constant 0.00999999977 : f32
    %6 = vector.broadcast %cst_5 : f32 to vector<128x256xf32>
    %7 = arith.mulf %6, %5 : vector<128x256xf32>
    %8 = arith.maximumf %5, %7 : vector<128x256xf32>
    %c0_6 = arith.constant 0 : index
    %c0_7 = arith.constant 0 : index
    %9 = vector.load %arg4[%c0_6, %c0_7] : memref<128x256xf32, #tpu.memory_space<vmem>>, vector<128x256xf32>
    tpu.vector_store %arg4[%c0_6, %c0_7], %8 {strides = array<i32>} : memref<128x256xf32, #tpu.memory_space<vmem>>, vector<128x256xf32>,
    return
  }
  func.func @transform_0(%arg0: i32) -> (i32, i32) {
    %c0_i32 = arith.constant 0 : i32
    %c0_i32_0 = arith.constant 0 : i32
    %c0_i32_1 = arith.constant 0 : i32
    return %c0_i32, %c0_i32_0 : i32, i32
  }
  func.func @transform_1(%arg0: i32) -> (i32, i32) {
    %c0_i32 = arith.constant 0 : i32
    %c0_i32_0 = arith.constant 0 : i32
    return %c0_i32, %arg0 : i32, i32
  }
  func.func @transform_2(%arg0: i32) -> (i32, i32) {
    %c0_i32 = arith.constant 0 : i32
    %c0_i32_0 = arith.constant 0 : i32
    %c0_i32_1 = arith.constant 0 : i32
    return %c0_i32, %c0_i32_0 : i32, i32
  }
  func.func @transform_3(%arg0: i32) -> (i32, i32) {
    %c0_i32 = arith.constant 0 : i32
    %c0_i32_0 = arith.constant 0 : i32
    return %c0_i32, %arg0 : i32, i32
  }
}

</mosaic_0001>

<llo_original>
// kernel: tile.18
$region0: #{tile.18}
  #allocation0 [shape = 's32[1]{0}', space=sflag, size = 0x4, scoped, tag = 'scoped memory for tile.18']
  %s0 = inlined_call_operand.vmem [shape: f32[32], index: 0, kind: input, shape index: {}]
  %s1 = inlined_call_operand.vmem [shape: f32[4,32], index: 1, kind: output, shape index: {}]
  // Predicated region
  $region2: #{tile.18} parent=0 // pred_check
    _
  $region3: #{tile.18} parent=0 // pred_check_branch
    %3 = sbr.rel (0) target = $region5
  $region4: #{tile.18} parent=0 // pred_region
    _
  $region5: #{tile.18} parent=0 // pred_fallthru
    _
  %v4 = vld [vmem:[%s0] ss:$0 sm:$0xff]
  %5 = vst [vmem:[%s1] sm:$0xf] %v4

// kernel: mul.13
$region0: #{mul.13}
  %s0 = inlined_call_operand.vmem [shape: f32[4,32], index: 0, kind: input, shape index: {}]
  %s1 = inlined_call_operand.vmem [shape: f32[128], index: 1, kind: output, shape index: {}]
  $region1: #{mul.13} parent=0
    #allocation0 [shape = 'u8[4096]{0}', space=vmem, size = 0x1000, scoped, tag = 'scoped mem for output reshape']
    #allocation1 [shape = 'u8[4096]{0}', space=vmem, size = 0x1000, scoped, tag = 'scoped mem for input reshape']
    %s3 = ssub.s32 16, 1
    %v4 = vld [vmem:[%s0] sm:%s3]
    %5 = vst [vmem:[#allocation1] sm:%s3] %v4
    %v6 = vld [vmem:[#allocation1] sm:$0x1]
    %vm7 = vcmask 261120
    %8 = vst.msk [vmem:[#allocation0] sm:$0x1] %vm7, %v6
    %s9 = scalar_lea.vmem [#allocation1], 3
    %v10 = vld [vmem:[%s9] sm:$0x1]
    %11 = vrot.lane.b32.xlu0 %v10, 96
    %v12 = vpop.permute.xlu0 %11
    %vm13 = vcmask 1048320
    %14 = vst.msk [vmem:[#allocation0] sm:$0x1] %vm13, %v12
    %s15 = scalar_lea.vmem [#allocation1], 2
    %v16 = vld [vmem:[%s15] sm:$0x1]
    %17 = vrot.lane.b32.xlu0 %v16, 64
    %v18 = vpop.permute.xlu0 %17
    %vm19 = vcmask 785920
    %20 = vst.msk [vmem:[#allocation0] sm:$0x1] %vm19, %v18
    %s21 = scalar_lea.vmem [#allocation1], 1
    %v22 = vld [vmem:[%s21] sm:$0x1]
    %23 = vrot.lane.b32.xlu0 %v22, 32
    %v24 = vpop.permute.xlu0 %23
    %vm25 = vcmask 523520
    %26 = vst.msk [vmem:[#allocation0] sm:$0x1] %vm25, %v24
    %s28 = ssub.s32 2, 1
    %v29 = vld [vmem:[#allocation0] sm:%s28]
    %s31 = ssub.s32 2, 1
    %32 = vst [vmem:[%s1] sm:%s31] %v29

// kernel: tile.0
$region0: #{tile.0}
  %s0 = inlined_call_operand.vmem [shape: f32[4,32], index: 0, kind: input, shape index: {}]
  %s1 = inlined_call_operand.vmem [shape: f32[128,1], index: 1, kind: output, shape index: {}]
  $region1: #{tile.0} parent=0
    #allocation0 [shape = 'u8[4096]{0}', space=vmem, size = 0x1000, scoped, tag = 'scoped mem for input reshape']
    %s3 = ssub.s32 16, 1
    %v4 = vld [vmem:[%s0] sm:%s3]
    %5 = vst [vmem:[#allocation0] sm:%s3] %v4
    %v6 = vld [vmem:[#allocation0] sm:$0xf]
    %vm7 = vcmask 7168
    %8 = vst.msk [vmem:[%s1] sm:$0x1] %vm7, %v6
    %s9 = scalar_lea.vmem %s1, 31
    %10 = vst.msk [vmem:[%s9] sm:$0x2] %vm7, %v6
    %s11 = scalar_lea.vmem %s1, 62
    %12 = vst.msk [vmem:[%s11] sm:$0x4] %vm7, %v6
    %s13 = scalar_lea.vmem %s1, 93
    %14 = vst.msk [vmem:[%s13] sm:$0x8] %vm7, %v6
    %v15 = vld [vmem:[#allocation0] sm:$0xf]
    %16 = vrot.lane.b32.xlu0 %v15, 127
    %v17 = vpop.permute.xlu0 %16
    %vm18 = vcmask 7168
    %s19 = scalar_lea.vmem %s1, 1
    %20 = vst.msk [vmem:[%s19] sm:$0x1] %vm18, %v17
    %s21 = scalar_lea.vmem %s1, 32
    %22 = vst.msk [vmem:[%s21] sm:$0x2] %vm18, %v17
    %s23 = scalar_lea.vmem %s1, 63
    %24 = vst.msk [vmem:[%s23] sm:$0x4] %vm18, %v17
    %s25 = scalar_lea.vmem %s1, 94
    %26 = vst.msk [vmem:[%s25] sm:$0x8] %vm18, %v17
    %v27 = vld [vmem:[#allocation0] sm:$0xf]
    %28 = vrot.lane.b32.xlu0 %v27, 126
    %v29 = vpop.permute.xlu0 %28
    %vm30 = vcmask 7168
    %s31 = scalar_lea.vmem %s1, 2
    %32 = vst.msk [vmem:[%s31] sm:$0x1] %vm30, %v29
    %s33 = scalar_lea.vmem %s1, 33
    %34 = vst.msk [vmem:[%s33] sm:$0x2] %vm30, %v29
    %s35 = scalar_lea.vmem %s1, 64
    %36 = vst.msk [vmem:[%s35] sm:$0x4] %vm30, %v29
    %s37 = scalar_lea.vmem %s1, 95
    %38 = vst.msk [vmem:[%s37] sm:$0x8] %vm30, %v29
    %v39 = vld [vmem:[#allocation0] sm:$0xf]
    %40 = vrot.lane.b32.xlu0 %v39, 125
    %v41 = vpop.permute.xlu0 %40
    %vm42 = vcmask 7168
    %s43 = scalar_lea.vmem %s1, 3
    %44 = vst.msk [vmem:[%s43] sm:$0x1] %vm42, %v41
    %s45 = scalar_lea.vmem %s1, 34
    %46 = vst.msk [vmem:[%s45] sm:$0x2] %vm42, %v41
    %s47 = scalar_lea.vmem %s1, 65
    %48 = vst.msk [vmem:[%s47] sm:$0x4] %vm42, %v41
    %s49 = scalar_lea.vmem %s1, 96
    %50 = vst.msk [vmem:[%s49] sm:$0x8] %vm42, %v41
    %v51 = vld [vmem:[#allocation0] sm:$0xf]
    %52 = vrot.lane.b32.xlu0 %v51, 124
    %v53 = vpop.permute.xlu0 %52
    %vm54 = vcmask 7168
    %s55 = scalar_lea.vmem %s1, 4
    %56 = vst.msk [vmem:[%s55] sm:$0x1] %vm54, %v53
    %s57 = scalar_lea.vmem %s1, 35
    %58 = vst.msk [vmem:[%s57] sm:$0x2] %vm54, %v53
    %s59 = scalar_lea.vmem %s1, 66
    %60 = vst.msk [vmem:[%s59] sm:$0x4] %vm54, %v53
    %s61 = scalar_lea.vmem %s1, 97
    %62 = vst.msk [vmem:[%s61] sm:$0x8] %vm54, %v53
    %v63 = vld [vmem:[#allocation0] sm:$0xf]
    %64 = vrot.lane.b32.xlu0 %v63, 123
    %v65 = vpop.permute.xlu0 %64
    %vm66 = vcmask 7168
    %s67 = scalar_lea.vmem %s1, 5
    %68 = vst.msk [vmem:[%s67] sm:$0x1] %vm66, %v65
    %s69 = scalar_lea.vmem %s1, 36
    %70 = vst.msk [vmem:[%s69] sm:$0x2] %vm66, %v65
    %s71 = scalar_lea.vmem %s1, 67
    %72 = vst.msk [vmem:[%s71] sm:$0x4] %vm66, %v65
    %s73 = scalar_lea.vmem %s1, 98
    %74 = vst.msk [vmem:[%s73] sm:$0x8] %vm66, %v65
    %v75 = vld [vmem:[#allocation0] sm:$0xf]
    %76 = vrot.lane.b32.xlu0 %v75, 122
    %v77 = vpop.permute.xlu0 %76
    %vm78 = vcmask 7168
    %s79 = scalar_lea.vmem %s1, 6
    %80 = vst.msk [vmem:[%s79] sm:$0x1] %vm78, %v77
    %s81 = scalar_lea.vmem %s1, 37
    %82 = vst.msk [vmem:[%s81] sm:$0x2] %vm78, %v77
    %s83 = scalar_lea.vmem %s1, 68
    %84 = vst.msk [vmem:[%s83] sm:$0x4] %vm78, %v77
    %s85 = scalar_lea.vmem %s1, 99
    %86 = vst.msk [vmem:[%s85] sm:$0x8] %vm78, %v77
    %v87 = vld [vmem:[#allocation0] sm:$0xf]
    %88 = vrot.lane.b32.xlu0 %v87, 121
    %v89 = vpop.permute.xlu0 %88
    %vm90 = vcmask 7168
    %s91 = scalar_lea.vmem %s1, 7
    %92 = vst.msk [vmem:[%s91] sm:$0x1] %vm90, %v89
    %s93 = scalar_lea.vmem %s1, 38
    %94 = vst.msk [vmem:[%s93] sm:$0x2] %vm90, %v89
    %s95 = scalar_lea.vmem %s1, 69
    %96 = vst.msk [vmem:[%s95] sm:$0x4] %vm90, %v89
    %s97 = scalar_lea.vmem %s1, 100
    %98 = vst.msk [vmem:[%s97] sm:$0x8] %vm90, %v89
    %v99 = vld [vmem:[#allocation0] sm:$0xf]
    %100 = vrot.lane.b32.xlu0 %v99, 120
    %v101 = vpop.permute.xlu0 %100
    %vm102 = vcmask 7168
    %s103 = scalar_lea.vmem %s1, 8
    %104 = vst.msk [vmem:[%s103] sm:$0x1] %vm102, %v101
    %s105 = scalar_lea.vmem %s1, 39
    %106 = vst.msk [vmem:[%s105] sm:$0x2] %vm102, %v101
    %s107 = scalar_lea.vmem %s1, 70
    %108 = vst.msk [vmem:[%s107] sm:$0x4] %vm102, %v101
    %s109 = scalar_lea.vmem %s1, 101
    %110 = vst.msk [vmem:[%s109] sm:$0x8] %vm102, %v101
    %v111 = vld [vmem:[#allocation0] sm:$0xf]
    %112 = vrot.lane.b32.xlu0 %v111, 119
    %v113 = vpop.permute.xlu0 %112
    %vm114 = vcmask 7168
    %s115 = scalar_lea.vmem %s1, 9
    %116 = vst.msk [vmem:[%s115] sm:$0x1] %vm114, %v113
    %s117 = scalar_lea.vmem %s1, 40
    %118 = vst.msk [vmem:[%s117] sm:$0x2] %vm114, %v113
    %s119 = scalar_lea.vmem %s1, 71
    %120 = vst.msk [vmem:[%s119] sm:$0x4] %vm114, %v113
    %s121 = scalar_lea.vmem %s1, 102
    %122 = vst.msk [vmem:[%s121] sm:$0x8] %vm114, %v113
    %v123 = vld [vmem:[#allocation0] sm:$0xf]
    %124 = vrot.lane.b32.xlu0 %v123, 118
    %v125 = vpop.permute.xlu0 %124
    %vm126 = vcmask 7168
    %s127 = scalar_lea.vmem %s1, 10
    %128 = vst.msk [vmem:[%s127] sm:$0x1] %vm126, %v125
    %s129 = scalar_lea.vmem %s1, 41
    %130 = vst.msk [vmem:[%s129] sm:$0x2] %vm126, %v125
    %s131 = scalar_lea.vmem %s1, 72
    %132 = vst.msk [vmem:[%s131] sm:$0x4] %vm126, %v125
    %s133 = scalar_lea.vmem %s1, 103
    %134 = vst.msk [vmem:[%s133] sm:$0x8] %vm126, %v125
    %v135 = vld [vmem:[#allocation0] sm:$0xf]
    %136 = vrot.lane.b32.xlu0 %v135, 117
    %v137 = vpop.permute.xlu0 %136
    %vm138 = vcmask 7168
    %s139 = scalar_lea.vmem %s1, 11
    %140 = vst.msk [vmem:[%s139] sm:$0x1] %vm138, %v137
    %s141 = scalar_lea.vmem %s1, 42
    %142 = vst.msk [vmem:[%s141] sm:$0x2] %vm138, %v137
    %s143 = scalar_lea.vmem %s1, 73
    %144 = vst.msk [vmem:[%s143] sm:$0x4] %vm138, %v137
    %s145 = scalar_lea.vmem %s1, 104
    %146 = vst.msk [vmem:[%s145] sm:$0x8] %vm138, %v137
    %v147 = vld [vmem:[#allocation0] sm:$0xf]
    %148 = vrot.lane.b32.xlu0 %v147, 116
    %v149 = vpop.permute.xlu0 %148
    %vm150 = vcmask 7168
    %s151 = scalar_lea.vmem %s1, 12
    %152 = vst.msk [vmem:[%s151] sm:$0x1] %vm150, %v149
    %s153 = scalar_lea.vmem %s1, 43
    %154 = vst.msk [vmem:[%s153] sm:$0x2] %vm150, %v149
    %s155 = scalar_lea.vmem %s1, 74
    %156 = vst.msk [vmem:[%s155] sm:$0x4] %vm150, %v149
    %s157 = scalar_lea.vmem %s1, 105
    %158 = vst.msk [vmem:[%s157] sm:$0x8] %vm150, %v149
    %v159 = vld [vmem:[#allocation0] sm:$0xf]
    %160 = vrot.lane.b32.xlu0 %v159, 115
    %v161 = vpop.permute.xlu0 %160
    %vm162 = vcmask 7168
    %s163 = scalar_lea.vmem %s1, 13
    %164 = vst.msk [vmem:[%s163] sm:$0x1] %vm162, %v161
    %s165 = scalar_lea.vmem %s1, 44
    %166 = vst.msk [vmem:[%s165] sm:$0x2] %vm162, %v161
    %s167 = scalar_lea.vmem %s1, 75
    %168 = vst.msk [vmem:[%s167] sm:$0x4] %vm162, %v161
    %s169 = scalar_lea.vmem %s1, 106
    %170 = vst.msk [vmem:[%s169] sm:$0x8] %vm162, %v161
    %v171 = vld [vmem:[#allocation0] sm:$0xf]
    %172 = vrot.lane.b32.xlu0 %v171, 114
    %v173 = vpop.permute.xlu0 %172
    %vm174 = vcmask 7168
    %s175 = scalar_lea.vmem %s1, 14
    %176 = vst.msk [vmem:[%s175] sm:$0x1] %vm174, %v173
    %s177 = scalar_lea.vmem %s1, 45
    %178 = vst.msk [vmem:[%s177] sm:$0x2] %vm174, %v173
    %s179 = scalar_lea.vmem %s1, 76
    %180 = vst.msk [vmem:[%s179] sm:$0x4] %vm174, %v173
    %s181 = scalar_lea.vmem %s1, 107
    %182 = vst.msk [vmem:[%s181] sm:$0x8] %vm174, %v173
    %v183 = vld [vmem:[#allocation0] sm:$0xf]
    %184 = vrot.lane.b32.xlu0 %v183, 113
    %v185 = vpop.permute.xlu0 %184
    %vm186 = vcmask 7168
    %s187 = scalar_lea.vmem %s1, 15
    %188 = vst.msk [vmem:[%s187] sm:$0x1] %vm186, %v185
    %s189 = scalar_lea.vmem %s1, 46
    %190 = vst.msk [vmem:[%s189] sm:$0x2] %vm186, %v185
    %s191 = scalar_lea.vmem %s1, 77
    %192 = vst.msk [vmem:[%s191] sm:$0x4] %vm186, %v185
    %s193 = scalar_lea.vmem %s1, 108
    %194 = vst.msk [vmem:[%s193] sm:$0x8] %vm186, %v185
    %v195 = vld [vmem:[#allocation0] sm:$0xf]
    %196 = vrot.lane.b32.xlu0 %v195, 112
    %v197 = vpop.permute.xlu0 %196
    %vm198 = vcmask 7168
    %s199 = scalar_lea.vmem %s1, 16
    %200 = vst.msk [vmem:[%s199] sm:$0x1] %vm198, %v197
    %s201 = scalar_lea.vmem %s1, 47
    %202 = vst.msk [vmem:[%s201] sm:$0x2] %vm198, %v197
    %s203 = scalar_lea.vmem %s1, 78
    %204 = vst.msk [vmem:[%s203] sm:$0x4] %vm198, %v197
    %s205 = scalar_lea.vmem %s1, 109
    %206 = vst.msk [vmem:[%s205] sm:$0x8] %vm198, %v197
    %v207 = vld [vmem:[#allocation0] sm:$0xf]
    %208 = vrot.lane.b32.xlu0 %v207, 111
    %v209 = vpop.permute.xlu0 %208
    %vm210 = vcmask 7168
    %s211 = scalar_lea.vmem %s1, 17
    %212 = vst.msk [vmem:[%s211] sm:$0x1] %vm210, %v209
    %s213 = scalar_lea.vmem %s1, 48
    %214 = vst.msk [vmem:[%s213] sm:$0x2] %vm210, %v209
    %s215 = scalar_lea.vmem %s1, 79
    %216 = vst.msk [vmem:[%s215] sm:$0x4] %vm210, %v209
    %s217 = scalar_lea.vmem %s1, 110
    %218 = vst.msk [vmem:[%s217] sm:$0x8] %vm210, %v209
    %v219 = vld [vmem:[#allocation0] sm:$0xf]
    %220 = vrot.lane.b32.xlu0 %v219, 110
    %v221 = vpop.permute.xlu0 %220
    %vm222 = vcmask 7168
    %s223 = scalar_lea.vmem %s1, 18
    %224 = vst.msk [vmem:[%s223] sm:$0x1] %vm222, %v221
    %s225 = scalar_lea.vmem %s1, 49
    %226 = vst.msk [vmem:[%s225] sm:$0x2] %vm222, %v221
    %s227 = scalar_lea.vmem %s1, 80
    %228 = vst.msk [vmem:[%s227] sm:$0x4] %vm222, %v221
    %s229 = scalar_lea.vmem %s1, 111
    %230 = vst.msk [vmem:[%s229] sm:$0x8] %vm222, %v221
    %v231 = vld [vmem:[#allocation0] sm:$0xf]
    %232 = vrot.lane.b32.xlu0 %v231, 109
    %v233 = vpop.permute.xlu0 %232
    %vm234 = vcmask 7168
    %s235 = scalar_lea.vmem %s1, 19
    %236 = vst.msk [vmem:[%s235] sm:$0x1] %vm234, %v233
    %s237 = scalar_lea.vmem %s1, 50
    %238 = vst.msk [vmem:[%s237] sm:$0x2] %vm234, %v233
    %s239 = scalar_lea.vmem %s1, 81
    %240 = vst.msk [vmem:[%s239] sm:$0x4] %vm234, %v233
    %s241 = scalar_lea.vmem %s1, 112
    %242 = vst.msk [vmem:[%s241] sm:$0x8] %vm234, %v233
    %v243 = vld [vmem:[#allocation0] sm:$0xf]
    %244 = vrot.lane.b32.xlu0 %v243, 108
    %v245 = vpop.permute.xlu0 %244
    %vm246 = vcmask 7168
    %s247 = scalar_lea.vmem %s1, 20
    %248 = vst.msk [vmem:[%s247] sm:$0x1] %vm246, %v245
    %s249 = scalar_lea.vmem %s1, 51
    %250 = vst.msk [vmem:[%s249] sm:$0x2] %vm246, %v245
    %s251 = scalar_lea.vmem %s1, 82
    %252 = vst.msk [vmem:[%s251] sm:$0x4] %vm246, %v245
    %s253 = scalar_lea.vmem %s1, 113
    %254 = vst.msk [vmem:[%s253] sm:$0x8] %vm246, %v245
    %v255 = vld [vmem:[#allocation0] sm:$0xf]
    %256 = vrot.lane.b32.xlu0 %v255, 107
    %v257 = vpop.permute.xlu0 %256
    %vm258 = vcmask 7168
    %s259 = scalar_lea.vmem %s1, 21
    %260 = vst.msk [vmem:[%s259] sm:$0x1] %vm258, %v257
    %s261 = scalar_lea.vmem %s1, 52
    %262 = vst.msk [vmem:[%s261] sm:$0x2] %vm258, %v257
    %s263 = scalar_lea.vmem %s1, 83
    %264 = vst.msk [vmem:[%s263] sm:$0x4] %vm258, %v257
    %s265 = scalar_lea.vmem %s1, 114
    %266 = vst.msk [vmem:[%s265] sm:$0x8] %vm258, %v257
    %v267 = vld [vmem:[#allocation0] sm:$0xf]
    %268 = vrot.lane.b32.xlu0 %v267, 106
    %v269 = vpop.permute.xlu0 %268
    %vm270 = vcmask 7168
    %s271 = scalar_lea.vmem %s1, 22
    %272 = vst.msk [vmem:[%s271] sm:$0x1] %vm270, %v269
    %s273 = scalar_lea.vmem %s1, 53
    %274 = vst.msk [vmem:[%s273] sm:$0x2] %vm270, %v269
    %s275 = scalar_lea.vmem %s1, 84
    %276 = vst.msk [vmem:[%s275] sm:$0x4] %vm270, %v269
    %s277 = scalar_lea.vmem %s1, 115
    %278 = vst.msk [vmem:[%s277] sm:$0x8] %vm270, %v269
    %v279 = vld [vmem:[#allocation0] sm:$0xf]
    %280 = vrot.lane.b32.xlu0 %v279, 105
    %v281 = vpop.permute.xlu0 %280
    %vm282 = vcmask 7168
    %s283 = scalar_lea.vmem %s1, 23
    %284 = vst.msk [vmem:[%s283] sm:$0x1] %vm282, %v281
    %s285 = scalar_lea.vmem %s1, 54
    %286 = vst.msk [vmem:[%s285] sm:$0x2] %vm282, %v281
    %s287 = scalar_lea.vmem %s1, 85
    %288 = vst.msk [vmem:[%s287] sm:$0x4] %vm282, %v281
    %s289 = scalar_lea.vmem %s1, 116
    %290 = vst.msk [vmem:[%s289] sm:$0x8] %vm282, %v281
    %v291 = vld [vmem:[#allocation0] sm:$0xf]
    %292 = vrot.lane.b32.xlu0 %v291, 104
    %v293 = vpop.permute.xlu0 %292
    %vm294 = vcmask 7168
    %s295 = scalar_lea.vmem %s1, 24
    %296 = vst.msk [vmem:[%s295] sm:$0x1] %vm294, %v293
    %s297 = scalar_lea.vmem %s1, 55
    %298 = vst.msk [vmem:[%s297] sm:$0x2] %vm294, %v293
    %s299 = scalar_lea.vmem %s1, 86
    %300 = vst.msk [vmem:[%s299] sm:$0x4] %vm294, %v293
    %s301 = scalar_lea.vmem %s1, 117
    %302 = vst.msk [vmem:[%s301] sm:$0x8] %vm294, %v293
    %v303 = vld [vmem:[#allocation0] sm:$0xf]
    %304 = vrot.lane.b32.xlu0 %v303, 103
    %v305 = vpop.permute.xlu0 %304
    %vm306 = vcmask 7168
    %s307 = scalar_lea.vmem %s1, 25
    %308 = vst.msk [vmem:[%s307] sm:$0x1] %vm306, %v305
    %s309 = scalar_lea.vmem %s1, 56
    %310 = vst.msk [vmem:[%s309] sm:$0x2] %vm306, %v305
    %s311 = scalar_lea.vmem %s1, 87
    %312 = vst.msk [vmem:[%s311] sm:$0x4] %vm306, %v305
    %s313 = scalar_lea.vmem %s1, 118
    %314 = vst.msk [vmem:[%s313] sm:$0x8] %vm306, %v305
    %v315 = vld [vmem:[#allocation0] sm:$0xf]
    %316 = vrot.lane.b32.xlu0 %v315, 102
    %v317 = vpop.permute.xlu0 %316
    %vm318 = vcmask 7168
    %s319 = scalar_lea.vmem %s1, 26
    %320 = vst.msk [vmem:[%s319] sm:$0x1] %vm318, %v317
    %s321 = scalar_lea.vmem %s1, 57
    %322 = vst.msk [vmem:[%s321] sm:$0x2] %vm318, %v317
    %s323 = scalar_lea.vmem %s1, 88
    %324 = vst.msk [vmem:[%s323] sm:$0x4] %vm318, %v317
    %s325 = scalar_lea.vmem %s1, 119
    %326 = vst.msk [vmem:[%s325] sm:$0x8] %vm318, %v317
    %v327 = vld [vmem:[#allocation0] sm:$0xf]
    %328 = vrot.lane.b32.xlu0 %v327, 101
    %v329 = vpop.permute.xlu0 %328
    %vm330 = vcmask 7168
    %s331 = scalar_lea.vmem %s1, 27
    %332 = vst.msk [vmem:[%s331] sm:$0x1] %vm330, %v329
    %s333 = scalar_lea.vmem %s1, 58
    %334 = vst.msk [vmem:[%s333] sm:$0x2] %vm330, %v329
    %s335 = scalar_lea.vmem %s1, 89
    %336 = vst.msk [vmem:[%s335] sm:$0x4] %vm330, %v329
    %s337 = scalar_lea.vmem %s1, 120
    %338 = vst.msk [vmem:[%s337] sm:$0x8] %vm330, %v329
    %v339 = vld [vmem:[#allocation0] sm:$0xf]
    %340 = vrot.lane.b32.xlu0 %v339, 100
    %v341 = vpop.permute.xlu0 %340
    %vm342 = vcmask 7168
    %s343 = scalar_lea.vmem %s1, 28
    %344 = vst.msk [vmem:[%s343] sm:$0x1] %vm342, %v341
    %s345 = scalar_lea.vmem %s1, 59
    %346 = vst.msk [vmem:[%s345] sm:$0x2] %vm342, %v341
    %s347 = scalar_lea.vmem %s1, 90
    %348 = vst.msk [vmem:[%s347] sm:$0x4] %vm342, %v341
    %s349 = scalar_lea.vmem %s1, 121
    %350 = vst.msk [vmem:[%s349] sm:$0x8] %vm342, %v341
    %v351 = vld [vmem:[#allocation0] sm:$0xf]
    %352 = vrot.lane.b32.xlu0 %v351, 99
    %v353 = vpop.permute.xlu0 %352
    %vm354 = vcmask 7168
    %s355 = scalar_lea.vmem %s1, 29
    %356 = vst.msk [vmem:[%s355] sm:$0x1] %vm354, %v353
    %s357 = scalar_lea.vmem %s1, 60
    %358 = vst.msk [vmem:[%s357] sm:$0x2] %vm354, %v353
    %s359 = scalar_lea.vmem %s1, 91
    %360 = vst.msk [vmem:[%s359] sm:$0x4] %vm354, %v353
    %s361 = scalar_lea.vmem %s1, 122
    %362 = vst.msk [vmem:[%s361] sm:$0x8] %vm354, %v353
    %v363 = vld [vmem:[#allocation0] sm:$0xf]
    %364 = vrot.lane.b32.xlu0 %v363, 98
    %v365 = vpop.permute.xlu0 %364
    %vm366 = vcmask 7168
    %s367 = scalar_lea.vmem %s1, 30
    %368 = vst.msk [vmem:[%s367] sm:$0x1] %vm366, %v365
    %s369 = scalar_lea.vmem %s1, 61
    %370 = vst.msk [vmem:[%s369] sm:$0x2] %vm366, %v365
    %s371 = scalar_lea.vmem %s1, 92
    %372 = vst.msk [vmem:[%s371] sm:$0x4] %vm366, %v365
    %s373 = scalar_lea.vmem %s1, 123
    %374 = vst.msk [vmem:[%s373] sm:$0x8] %vm366, %v365
    %v375 = vld [vmem:[#allocation0] sm:$0xf]
    %376 = vrot.lane.b32.xlu0 %v375, 97
    %v377 = vpop.permute.xlu0 %376
    %vm378 = vcmask 7168
    %s379 = scalar_lea.vmem %s1, 31
    %380 = vst.msk [vmem:[%s379] sm:$0x1] %vm378, %v377
    %s381 = scalar_lea.vmem %s1, 62
    %382 = vst.msk [vmem:[%s381] sm:$0x2] %vm378, %v377
    %s383 = scalar_lea.vmem %s1, 93
    %384 = vst.msk [vmem:[%s383] sm:$0x4] %vm378, %v377
    %s385 = scalar_lea.vmem %s1, 124
    %386 = vst.msk [vmem:[%s385] sm:$0x8] %vm378, %v377

// kernel: convt_forward.1
$region0: #{convt_forward.1}
  #allocation0 [shape = 'u32[]', space=smem, size = 0x4, offset = 0x4, fixed_abs, tag = 'smem constant byte address 0x4 - core index']
  #allocation1 [shape = 'u32[72,128]{1,0:T(1,128)}', space=vmem, size = 0x9000, scoped, tag = 'internal scratch']
  %s0 = inlined_call_operand.vmem [shape: f32[128,16], index: 0, kind: input, shape index: {}]
  %s1 = inlined_call_operand.vmem [shape: f32[16,512], index: 1, kind: input, shape index: {}]
  %s2 = inlined_call_operand.vmem [shape: f32[128,1], index: 2, kind: input, shape index: {}]
  %s3 = inlined_call_operand.vmem [shape: f32[128,512], index: 3, kind: output, shape index: {}]
  %s4 = sld [smem:[#allocation0]]
  $region87: #{convt_forward.1} parent=0
    _
  %s6 = ssub.s32 1, %s4
  %s7 = scalar_select 0, %s6, %s4
  $region1: #{convt_forward.1} parent=0
    #allocation2 [shape = 'u8[32768]{0}', space=vmem, size = 0x8000, scoped, tag = 'input window, operand 1']
    #allocation3 [shape = 'u8[262144]{0}', space=vmem, size = 0x40000, scoped, tag = 'output window, operand 0']
    loop: start=0, step=1, limit=4
    $region2: #{convt_forward.1} parent=1 // loop_pre_header
      _
    $region3: #{convt_forward.1} parent=1 // loop_header
      %s9 = sphi 0, %s13
      %p10 = scmp.ge.s32.totalorder %s9, 4
      %s17 = sphi 0, %s17
      %s19 = sphi 0, %s17
      %s20 = sphi 0, %s19
      %s34 = sphi 0, %s20
      %s40 = sphi 0, %s42
      %s43 = sphi 0, %s40
      %s44 = sphi 0, %s43
      %s60 = sphi 0, %s44
      %s64 = sphi 0, %s64
      %s66 = sphi 0, %s64
      %s67 = sphi 0, %s66
      %s81 = sphi 0, %s67
      %s87 = sphi 0, %s89
      %s90 = sphi 0, %s87
      %s91 = sphi 0, %s90
      %s107 = sphi 0, %s91
    $region4: #{convt_forward.1} parent=1 // loop_header_branch
      %12 = sbr.rel (%p10) target = $region8
    $region5: #{convt_forward.1} parent=1 // loop_body
      %s14 = ssub.s32 %s9, 1
      %s15 = ssub.s32 %s9, 2
      %s16 = sadd.s32 %s9, 1
      %s18 = sadd.s32 %s17, 1
      %p21 = scmp.eq.s32.totalorder %s9, 1
      %p22 = scmp.ne.s32.totalorder %s17, %s19
      %p23 = scmp.eq.s32.totalorder %s9, 0
      %p24 = por %p22, %p23
      %p25 = scmp.ne.s32.totalorder %s17, %s19
      %p26 = scmp.eq.s32.totalorder %s14, 1
      %p27 = por %p25, %p26
      %p28 = scmp.ne.s32.totalorder %s19, %s20
      %p29 = scmp.eq.s32.totalorder %s14, 0
      %p30 = por %p28, %p29
      %p31 = scmp.ne.s32.totalorder %s19, %s20
      %p32 = scmp.eq.s32.totalorder %s15, 1
      %p33 = por %p31, %p32
      %p35 = scmp.ne.s32.totalorder %s20, %s34
      %p36 = scmp.eq.s32.totalorder %s15, 0
      %p37 = por %p35, %p36
      %s38 = ssub.s32 %s9, %s16
      %p39 = scmp.eq.s32.totalorder %s38, 0
      %s41 = sadd.s32 %s40, 1
      %s42 = scalar_select %p39, %s40, %s41
      %p45 = pneg %p39
      %p46 = scmp.eq.s32.totalorder %s9, 1
      %p47 = por %p45, %p46
      %p48 = scmp.ne.s32.totalorder %s40, %s43
      %p49 = scmp.eq.s32.totalorder %s9, 0
      %p50 = por %p48, %p49
      %p51 = scmp.ne.s32.totalorder %s40, %s43
      %p52 = scmp.eq.s32.totalorder %s14, 1
      %p53 = por %p51, %p52
      %p54 = scmp.ne.s32.totalorder %s43, %s44
      %p55 = scmp.eq.s32.totalorder %s14, 0
      %p56 = por %p54, %p55
      %p57 = scmp.ne.s32.totalorder %s43, %s44
      %p58 = scmp.eq.s32.totalorder %s15, 1
      %p59 = por %p57, %p58
      %p61 = scmp.ne.s32.totalorder %s44, %s60
      %p62 = scmp.eq.s32.totalorder %s15, 0
      %p63 = por %p61, %p62
      %s65 = sadd.s32 %s64, 1
      %p68 = scmp.eq.s32.totalorder %s9, 1
      %p69 = scmp.ne.s32.totalorder %s64, %s66
      %p70 = scmp.eq.s32.totalorder %s9, 0
      %p71 = por %p69, %p70
      %p72 = scmp.ne.s32.totalorder %s64, %s66
      %p73 = scmp.eq.s32.totalorder %s14, 1
      %p74 = por %p72, %p73
      %p75 = scmp.ne.s32.totalorder %s66, %s67
      %p76 = scmp.eq.s32.totalorder %s14, 0
      %p77 = por %p75, %p76
      %p78 = scmp.ne.s32.totalorder %s66, %s67
      %p79 = scmp.eq.s32.totalorder %s15, 1
      %p80 = por %p78, %p79
      %p82 = scmp.ne.s32.totalorder %s67, %s81
      %p83 = scmp.eq.s32.totalorder %s15, 0
      %p84 = por %p82, %p83
      %s85 = ssub.s32 %s9, %s16
      %p86 = scmp.eq.s32.totalorder %s85, 0
      %s88 = sadd.s32 %s87, 1
      %s89 = scalar_select %p86, %s87, %s88
      %p92 = pneg %p86
      %p93 = scmp.eq.s32.totalorder %s9, 1
      %p94 = por %p92, %p93
      %p95 = scmp.ne.s32.totalorder %s87, %s90
      %p96 = scmp.eq.s32.totalorder %s9, 0
      %p97 = por %p95, %p96
      %p98 = scmp.ne.s32.totalorder %s87, %s90
      %p99 = scmp.eq.s32.totalorder %s14, 1
      %p100 = por %p98, %p99
      %p101 = scmp.ne.s32.totalorder %s90, %s91
      %p102 = scmp.eq.s32.totalorder %s14, 0
      %p103 = por %p101, %p102
      %p104 = scmp.ne.s32.totalorder %s90, %s91
      %p105 = scmp.eq.s32.totalorder %s15, 1
      %p106 = por %p104, %p105
      %p108 = scmp.ne.s32.totalorder %s91, %s107
      %p109 = scmp.eq.s32.totalorder %s15, 0
      %p110 = por %p108, %p109
      %p111 = scmp.le.s32.totalorder 1, %s9
      %p112 = scmp.lt.s32.totalorder %s9, 3
      %p113 = pnand %p111, %p112
      %p114 = pneg %p113
      // Predicated region
      $region9: #{convt_forward.1} parent=5 // pred_check
        _
      $region10: #{convt_forward.1} parent=5 // pred_check_branch
        %116 = sbr.rel (%p113) target = $region12
      $region11: #{convt_forward.1} parent=5 // pred_region
        %s117 = ssub.s32 %s9, 1
        // Predicated region
        $region13: #{convt_forward.1} parent=11 // pred_check
          %p118 = pneg %p30
        $region14: #{convt_forward.1} parent=11 // pred_check_branch
          %120 = sbr.rel (%p118) target = $region16
        $region15: #{convt_forward.1} parent=11 // pred_region
          _
        $region16: #{convt_forward.1} parent=11 // pred_fallthru
          _
        // Predicated region
        $region17: #{convt_forward.1} parent=11 // pred_check
          %p121 = pneg %p77
        $region18: #{convt_forward.1} parent=11 // pred_check_branch
          %123 = sbr.rel (%p121) target = $region20
        $region19: #{convt_forward.1} parent=11 // pred_region
          _
        $region20: #{convt_forward.1} parent=11 // pred_fallthru
          _
      $region12: #{convt_forward.1} parent=5 // pred_fallthru
        _
      %p124 = scmp.lt.s32.totalorder %s9, 2
      // Predicated region
      $region21: #{convt_forward.1} parent=5 // pred_check
        %p125 = pneg %p124
      $region22: #{convt_forward.1} parent=5 // pred_check_branch
        %127 = sbr.rel (%p125) target = $region24
      $region23: #{convt_forward.1} parent=5 // pred_region
        // Predicated region
        $region25: #{convt_forward.1} parent=23 // pred_check
          %p128 = pneg %p50
        $region26: #{convt_forward.1} parent=23 // pred_check_branch
          %130 = sbr.rel (%p128) target = $region28
        $region27: #{convt_forward.1} parent=23 // pred_region
          %s131 = sand.u32 %s40, 1
          %s132 = sand.u32 %s40, 1
          %s133 = smul.addr %s132, 32
          %s134 = scalar_lea.vmem [#allocation2], %s133
          %s135 = smul.u32 2, %s9
          %s136 = smul.addr %s135, 8
          %s137 = scalar_lea.vmem %s1, %s136
          // Predicated region
          $region29: #{convt_forward.1} parent=27 // pred_check
            _
          $region30: #{convt_forward.1} parent=27 // pred_check_branch
            %139 = sbr.rel (0) target = $region32
          $region31: #{convt_forward.1} parent=27 // pred_region
            // Predicated region
            $region33: #{convt_forward.1} parent=31 // pred_check
              _
            $region34: #{convt_forward.1} parent=31 // pred_check_branch
              %141 = sbr.rel (0) target = $region36
            $region35: #{convt_forward.1} parent=31 // pred_region
              loop: start=0, step=1, limit=1
              $region37: #{convt_forward.1} parent=35 // loop_pre_header
                _
              $region38: #{convt_forward.1} parent=35 // loop_header
                %s143 = sphi 0, %s147
                %p144 = scmp.ge.s32.totalorder %s143, 1
                %s148 = sphi %s137, %s137
                %s149 = sphi %s134, %s134
              $region39: #{convt_forward.1} parent=35 // loop_header_branch
                %146 = sbr.rel (%p144) target = $region43
              $region40: #{convt_forward.1} parent=35 // loop_body
                %v150 = vld [vmem:[%s148] sm:$0xff]
                %151 = vst [vmem:[%s149] sm:$0xff] %v150
                %v152 = vld [vmem:[%s148 + $0x8] sm:$0xff]
                %153 = vst [vmem:[%s149 + $0x8] sm:$0xff] %v152
                %v154 = vld [vmem:[%s148 + $0x20] sm:$0xff]
                %155 = vst [vmem:[%s149 + $0x10] sm:$0xff] %v154
                %v156 = vld [vmem:[%s148 + $0x28] sm:$0xff]
                %157 = vst [vmem:[%s149 + $0x18] sm:$0xff] %v156
              $region41: #{convt_forward.1} parent=35 // loop_footer
                %s147 = sadd.s32 1, %s143
              $region42: #{convt_forward.1} parent=35 // loop_footer_branch
                %142 = sbr.rel target = $region38
              $region43: #{convt_forward.1} parent=35 // loop_exit
                _
            $region36: #{convt_forward.1} parent=31 // pred_fallthru
              _
            // Predicated region
            $region44: #{convt_forward.1} parent=31 // pred_check
              _
            $region45: #{convt_forward.1} parent=31 // pred_check_branch
              %159 = sbr.rel target = $region47
            $region46: #{convt_forward.1} parent=31 // pred_region
              _
            $region47: #{convt_forward.1} parent=31 // pred_fallthru
              _
          $region32: #{convt_forward.1} parent=27 // pred_fallthru
            _
          %160 = vnop
        $region28: #{convt_forward.1} parent=23 // pred_fallthru
          _
      $region24: #{convt_forward.1} parent=5 // pred_fallthru
        _
      %p161 = scmp.le.s32.totalorder 1, %s9
      %p162 = scmp.lt.s32.totalorder %s9, 3
      %p163 = pnand %p161, %p162
      %p164 = pneg %p163
      // Predicated region
      $region48: #{convt_forward.1} parent=5 // pred_check
        _
      $region49: #{convt_forward.1} parent=5 // pred_check_branch
        %166 = sbr.rel (%p163) target = $region51
      $region50: #{convt_forward.1} parent=5 // pred_region
        %s167 = ssub.s32 %s9, 1
        %s168 = sand.u32 %s43, 1
        %s169 = sand.u32 %s43, 1
        %s170 = smul.addr %s169, 32
        %s171 = scalar_lea.vmem [#allocation2], %s170
        // Predicated region
        $region52: #{convt_forward.1} parent=50 // pred_check
          %p172 = pneg %p56
        $region53: #{convt_forward.1} parent=50 // pred_check_branch
          %174 = sbr.rel (%p172) target = $region55
        $region54: #{convt_forward.1} parent=50 // pred_region
          _
        $region55: #{convt_forward.1} parent=50 // pred_fallthru
          _
        %p175 = pneg %p30
        %p176 = pneg %p27
        %s177 = sand.u32 %s43, 1
        %s178 = sand.u32 %s43, 1
        %s179 = smul.addr %s178, 32
        %s180 = scalar_lea.vmem [#allocation2], %s179
        %p181 = pneg %p56
        %p182 = pneg %p53
        %p183 = pneg %p77
        %p184 = pneg %p74
        %p185 = pneg %p103
        %p186 = pneg %p100
        %s187 = sand.u32 %s90, 1
        %s188 = sand.u32 %s90, 1
        %s189 = smul.addr %s188, 256
        %s190 = scalar_lea.vmem [#allocation3], %s189
        %s191 = smul.u32 2, %s14
        %s192 = smul.u32 2, %s14
        %v193 = vld [vmem:[%s0] sm:$0xff]
        %v194 = vld [vmem:[%s0 + $0x8] sm:$0xff]
        %v195 = vld [vmem:[%s0 + $0x10] sm:$0xff]
        %v196 = vld [vmem:[%s0 + $0x18] sm:$0xff]
        %v197 = vld [vmem:[%s0 + $0x20] sm:$0xff]
        %v198 = vld [vmem:[%s0 + $0x28] sm:$0xff]
        %v199 = vld [vmem:[%s0 + $0x30] sm:$0xff]
        %v200 = vld [vmem:[%s0 + $0x38] sm:$0xff]
        %v201 = vld [vmem:[%s0 + $0x40] sm:$0xff]
        %v202 = vld [vmem:[%s0 + $0x48] sm:$0xff]
        %v203 = vld [vmem:[%s0 + $0x50] sm:$0xff]
        %v204 = vld [vmem:[%s0 + $0x58] sm:$0xff]
        %v205 = vld [vmem:[%s0 + $0x60] sm:$0xff]
        %v206 = vld [vmem:[%s0 + $0x68] sm:$0xff]
        %v207 = vld [vmem:[%s0 + $0x70] sm:$0xff]
        %v208 = vld [vmem:[%s0 + $0x78] sm:$0xff]
        %v209 = vld [vmem:[%s171] sm:$0xff]
        %v210 = vld [vmem:[%s171 + $0x8] sm:$0xff]
        %v211 = vld [vmem:[%s171 + $0x10] sm:$0xff]
        %v212 = vld [vmem:[%s171 + $0x18] sm:$0xff]
        %v213 = vld [vmem:[%s2] sm:$0xff]
        %v214 = vld [vmem:[%s2 + $0x8] sm:$0xff]
        %v215 = vld [vmem:[%s2 + $0x10] sm:$0xff]
        %v216 = vld [vmem:[%s2 + $0x18] sm:$0xff]
        %v217 = vld [vmem:[%s2 + $0x20] sm:$0xff]
        %v218 = vld [vmem:[%s2 + $0x28] sm:$0xff]
        %v219 = vld [vmem:[%s2 + $0x30] sm:$0xff]
        %v220 = vld [vmem:[%s2 + $0x38] sm:$0xff]
        %v221 = vld [vmem:[%s2 + $0x40] sm:$0xff]
        %v222 = vld [vmem:[%s2 + $0x48] sm:$0xff]
        %v223 = vld [vmem:[%s2 + $0x50] sm:$0xff]
        %v224 = vld [vmem:[%s2 + $0x58] sm:$0xff]
        %v225 = vld [vmem:[%s2 + $0x60] sm:$0xff]
        %v226 = vld [vmem:[%s2 + $0x68] sm:$0xff]
        %v227 = vld [vmem:[%s2 + $0x70] sm:$0xff]
        %v228 = vld [vmem:[%s2 + $0x78] sm:$0xff]
        %230 = vset.pattern.permute.xlu0 0
        %231 = vperm.xlu0 %230, %v213
        %v232 = vpop.permute.xlu0 %231
        %235 = vset.pattern.permute.xlu0 0
        %236 = vperm.xlu0 %235, %v214
        %v237 = vpop.permute.xlu0 %236
        %240 = vset.pattern.permute.xlu0 0
        %241 = vperm.xlu0 %240, %v215
        %v242 = vpop.permute.xlu0 %241
        %245 = vset.pattern.permute.xlu0 0
        %246 = vperm.xlu0 %245, %v216
        %v247 = vpop.permute.xlu0 %246
        %250 = vset.pattern.permute.xlu0 0
        %251 = vperm.xlu0 %250, %v217
        %v252 = vpop.permute.xlu0 %251
        %255 = vset.pattern.permute.xlu0 0
        %256 = vperm.xlu0 %255, %v218
        %v257 = vpop.permute.xlu0 %256
        %260 = vset.pattern.permute.xlu0 0
        %261 = vperm.xlu0 %260, %v219
        %v262 = vpop.permute.xlu0 %261
        %265 = vset.pattern.permute.xlu0 0
        %266 = vperm.xlu0 %265, %v220
        %v267 = vpop.permute.xlu0 %266
        %270 = vset.pattern.permute.xlu0 0
        %271 = vperm.xlu0 %270, %v221
        %v272 = vpop.permute.xlu0 %271
        %275 = vset.pattern.permute.xlu0 0
        %276 = vperm.xlu0 %275, %v222
        %v277 = vpop.permute.xlu0 %276
        %280 = vset.pattern.permute.xlu0 0
        %281 = vperm.xlu0 %280, %v223
        %v282 = vpop.permute.xlu0 %281
        %285 = vset.pattern.permute.xlu0 0
        %286 = vperm.xlu0 %285, %v224
        %v287 = vpop.permute.xlu0 %286
        %290 = vset.pattern.permute.xlu0 0
        %291 = vperm.xlu0 %290, %v225
        %v292 = vpop.permute.xlu0 %291
        %295 = vset.pattern.permute.xlu0 0
        %296 = vperm.xlu0 %295, %v226
        %v297 = vpop.permute.xlu0 %296
        %300 = vset.pattern.permute.xlu0 0
        %301 = vperm.xlu0 %300, %v227
        %v302 = vpop.permute.xlu0 %301
        %305 = vset.pattern.permute.xlu0 0
        %306 = vperm.xlu0 %305, %v228
        %v307 = vpop.permute.xlu0 %306
        %vm309 = vcmask 130048
        %v311 = vsel %vm309, %v193, 0
        %v314 = vsel %vm309, %v194, 0
        %v317 = vsel %vm309, %v195, 0
        %v320 = vsel %vm309, %v196, 0
        %v323 = vsel %vm309, %v197, 0
        %v326 = vsel %vm309, %v198, 0
        %v329 = vsel %vm309, %v199, 0
        %v332 = vsel %vm309, %v200, 0
        %v335 = vsel %vm309, %v201, 0
        %v338 = vsel %vm309, %v202, 0
        %v341 = vsel %vm309, %v203, 0
        %v344 = vsel %vm309, %v204, 0
        %v347 = vsel %vm309, %v205, 0
        %v350 = vsel %vm309, %v206, 0
        %v353 = vsel %vm309, %v207, 0
        %v356 = vsel %vm309, %v208, 0
        %358 = vmatpush.msra.mxu0 0.0
        %359 = vmatpush.msra.mxu0 0.0
        %360 = vmatpush.msra.mxu0 0.0
        %361 = vmatpush.msra.mxu0 0.0
        %362 = vmatpush.msra.mxu0 0.0
        %363 = vmatpush.msra.mxu0 0.0
        %364 = vmatpush.msra.mxu0 0.0
        %365 = vmatpush.msra.mxu0 0.0
        %366 = vmatpush.msra.mxu0 0.0
        %367 = vmatpush.msra.mxu0 0.0
        %368 = vmatpush.msra.mxu0 0.0
        %369 = vmatpush.msra.mxu0 0.0
        %370 = vmatpush.msra.mxu0 0.0
        %371 = vmatpush.msra.mxu0 0.0
        %372 = vmatpush.msra.mxu0 %v211
        %373 = vmatpush.msra.mxu0 %v209
        %374 = vmatmul.f32.gmra.mxu0 %v311
        %v375 = vpop.f32.mrf.mxu0
        %v376 = vadd.f32 %v232, %v375
        %377 = vmatmul.f32.gmra.mxu0 %v314
        %v378 = vpop.f32.mrf.mxu0
        %v379 = vadd.f32 %v237, %v378
        %380 = vmatmul.f32.gmra.mxu0 %v317
        %v381 = vpop.f32.mrf.mxu0
        %v382 = vadd.f32 %v242, %v381
        %383 = vmatmul.f32.gmra.mxu0 %v320
        %v384 = vpop.f32.mrf.mxu0
        %v385 = vadd.f32 %v247, %v384
        %386 = vmatmul.f32.gmra.mxu0 %v323
        %v387 = vpop.f32.mrf.mxu0
        %v388 = vadd.f32 %v252, %v387
        %389 = vmatmul.f32.gmra.mxu0 %v326
        %v390 = vpop.f32.mrf.mxu0
        %v391 = vadd.f32 %v257, %v390
        %392 = vmatmul.f32.gmra.mxu0 %v329
        %v393 = vpop.f32.mrf.mxu0
        %v394 = vadd.f32 %v262, %v393
        %395 = vmatmul.f32.gmra.mxu0 %v332
        %v396 = vpop.f32.mrf.mxu0
        %v397 = vadd.f32 %v267, %v396
        %398 = vmatmul.f32.gmra.mxu0 %v335
        %v399 = vpop.f32.mrf.mxu0
        %v400 = vadd.f32 %v272, %v399
        %401 = vmatmul.f32.gmra.mxu0 %v338
        %v402 = vpop.f32.mrf.mxu0
        %v403 = vadd.f32 %v277, %v402
        %404 = vmatmul.f32.gmra.mxu0 %v341
        %v405 = vpop.f32.mrf.mxu0
        %v406 = vadd.f32 %v282, %v405
        %407 = vmatmul.f32.gmra.mxu0 %v344
        %v408 = vpop.f32.mrf.mxu0
        %v409 = vadd.f32 %v287, %v408
        %410 = vmatmul.f32.gmra.mxu0 %v347
        %v411 = vpop.f32.mrf.mxu0
        %v412 = vadd.f32 %v292, %v411
        %413 = vmatmul.f32.gmra.mxu0 %v350
        %v414 = vpop.f32.mrf.mxu0
        %v415 = vadd.f32 %v297, %v414
        %416 = vmatmul.f32.gmra.mxu0 %v353
        %v417 = vpop.f32.mrf.mxu0
        %v418 = vadd.f32 %v302, %v417
        %419 = vmatmul.f32.gmra.mxu0 %v356
        %v420 = vpop.f32.mrf.mxu0
        %v421 = vadd.f32 %v307, %v420
        %422 = vdwg.mxu0
        %423 = vmatpush.msra.mxu0 0.0
        %424 = vmatpush.msra.mxu0 0.0
        %425 = vmatpush.msra.mxu0 0.0
        %426 = vmatpush.msra.mxu0 0.0
        %427 = vmatpush.msra.mxu0 0.0
        %428 = vmatpush.msra.mxu0 0.0
        %429 = vmatpush.msra.mxu0 0.0
        %430 = vmatpush.msra.mxu0 0.0
        %431 = vmatpush.msra.mxu0 0.0
        %432 = vmatpush.msra.mxu0 0.0
        %433 = vmatpush.msra.mxu0 0.0
        %434 = vmatpush.msra.mxu0 0.0
        %435 = vmatpush.msra.mxu0 0.0
        %436 = vmatpush.msra.mxu0 0.0
        %437 = vmatpush.msra.mxu0 %v212
        %438 = vmatpush.msra.mxu0 %v210
        %439 = vmatmul.f32.gmra.mxu0 %v311
        %v440 = vpop.f32.mrf.mxu0
        %v441 = vadd.f32 %v232, %v440
        %442 = vmatmul.f32.gmra.mxu0 %v314
        %v443 = vpop.f32.mrf.mxu0
        %v444 = vadd.f32 %v237, %v443
        %445 = vmatmul.f32.gmra.mxu0 %v317
        %v446 = vpop.f32.mrf.mxu0
        %v447 = vadd.f32 %v242, %v446
        %448 = vmatmul.f32.gmra.mxu0 %v320
        %v449 = vpop.f32.mrf.mxu0
        %v450 = vadd.f32 %v247, %v449
        %451 = vmatmul.f32.gmra.mxu0 %v323
        %v452 = vpop.f32.mrf.mxu0
        %v453 = vadd.f32 %v252, %v452
        %454 = vmatmul.f32.gmra.mxu0 %v326
        %v455 = vpop.f32.mrf.mxu0
        %v456 = vadd.f32 %v257, %v455
        %457 = vmatmul.f32.gmra.mxu0 %v329
        %v458 = vpop.f32.mrf.mxu0
        %v459 = vadd.f32 %v262, %v458
        %460 = vmatmul.f32.gmra.mxu0 %v332
        %v461 = vpop.f32.mrf.mxu0
        %v462 = vadd.f32 %v267, %v461
        %463 = vmatmul.f32.gmra.mxu0 %v335
        %v464 = vpop.f32.mrf.mxu0
        %v465 = vadd.f32 %v272, %v464
        %466 = vmatmul.f32.gmra.mxu0 %v338
        %v467 = vpop.f32.mrf.mxu0
        %v468 = vadd.f32 %v277, %v467
        %469 = vmatmul.f32.gmra.mxu0 %v341
        %v470 = vpop.f32.mrf.mxu0
        %v471 = vadd.f32 %v282, %v470
        %472 = vmatmul.f32.gmra.mxu0 %v344
        %v473 = vpop.f32.mrf.mxu0
        %v474 = vadd.f32 %v287, %v473
        %475 = vmatmul.f32.gmra.mxu0 %v347
        %v476 = vpop.f32.mrf.mxu0
        %v477 = vadd.f32 %v292, %v476
        %478 = vmatmul.f32.gmra.mxu0 %v350
        %v479 = vpop.f32.mrf.mxu0
        %v480 = vadd.f32 %v297, %v479
        %481 = vmatmul.f32.gmra.mxu0 %v353
        %v482 = vpop.f32.mrf.mxu0
        %v483 = vadd.f32 %v302, %v482
        %484 = vmatmul.f32.gmra.mxu0 %v356
        %v485 = vpop.f32.mrf.mxu0
        %v486 = vadd.f32 %v307, %v485
        %487 = vdwg.mxu0
        %v488 = vmul.f32 %v376, 0.01
        %v489 = vmul.f32 %v441, 0.01
        %v490 = vmul.f32 %v379, 0.01
        %v491 = vmul.f32 %v444, 0.01
        %v492 = vmul.f32 %v382, 0.01
        %v493 = vmul.f32 %v447, 0.01
        %v494 = vmul.f32 %v385, 0.01
        %v495 = vmul.f32 %v450, 0.01
        %v496 = vmul.f32 %v388, 0.01
        %v497 = vmul.f32 %v453, 0.01
        %v498 = vmul.f32 %v391, 0.01
        %v499 = vmul.f32 %v456, 0.01
        %v500 = vmul.f32 %v394, 0.01
        %v501 = vmul.f32 %v459, 0.01
        %v502 = vmul.f32 %v397, 0.01
        %v503 = vmul.f32 %v462, 0.01
        %v504 = vmul.f32 %v400, 0.01
        %v505 = vmul.f32 %v465, 0.01
        %v506 = vmul.f32 %v403, 0.01
        %v507 = vmul.f32 %v468, 0.01
        %v508 = vmul.f32 %v406, 0.01
        %v509 = vmul.f32 %v471, 0.01
        %v510 = vmul.f32 %v409, 0.01
        %v511 = vmul.f32 %v474, 0.01
        %v512 = vmul.f32 %v412, 0.01
        %v513 = vmul.f32 %v477, 0.01
        %v514 = vmul.f32 %v415, 0.01
        %v515 = vmul.f32 %v480, 0.01
        %v516 = vmul.f32 %v418, 0.01
        %v517 = vmul.f32 %v483, 0.01
        %v518 = vmul.f32 %v421, 0.01
        %v519 = vmul.f32 %v486, 0.01
        %v520 = vmax.f32 %v376, %v488
        %v521 = vmax.f32 %v441, %v489
        %v522 = vmax.f32 %v379, %v490
        %v523 = vmax.f32 %v444, %v491
        %v524 = vmax.f32 %v382, %v492
        %v525 = vmax.f32 %v447, %v493
        %v526 = vmax.f32 %v385, %v494
        %v527 = vmax.f32 %v450, %v495
        %v528 = vmax.f32 %v388, %v496
        %v529 = vmax.f32 %v453, %v497
        %v530 = vmax.f32 %v391, %v498
        %v531 = vmax.f32 %v456, %v499
        %v532 = vmax.f32 %v394, %v500
        %v533 = vmax.f32 %v459, %v501
        %v534 = vmax.f32 %v397, %v502
        %v535 = vmax.f32 %v462, %v503
        %v536 = vmax.f32 %v400, %v504
        %v537 = vmax.f32 %v465, %v505
        %v538 = vmax.f32 %v403, %v506
        %v539 = vmax.f32 %v468, %v507
        %v540 = vmax.f32 %v406, %v508
        %v541 = vmax.f32 %v471, %v509
        %v542 = vmax.f32 %v409, %v510
        %v543 = vmax.f32 %v474, %v511
        %v544 = vmax.f32 %v412, %v512
        %v545 = vmax.f32 %v477, %v513
        %v546 = vmax.f32 %v415, %v514
        %v547 = vmax.f32 %v480, %v515
        %v548 = vmax.f32 %v418, %v516
        %v549 = vmax.f32 %v483, %v517
        %v550 = vmax.f32 %v421, %v518
        %v551 = vmax.f32 %v486, %v519
        %552 = vst [vmem:[%s190] sm:$0xff] %v520
        %553 = vst [vmem:[%s190 + $0x8] sm:$0xff] %v521
        %554 = vst [vmem:[%s190 + $0x10] sm:$0xff] %v522
        %555 = vst [vmem:[%s190 + $0x18] sm:$0xff] %v523
        %556 = vst [vmem:[%s190 + $0x20] sm:$0xff] %v524
        %557 = vst [vmem:[%s190 + $0x28] sm:$0xff] %v525
        %558 = vst [vmem:[%s190 + $0x30] sm:$0xff] %v526
        %559 = vst [vmem:[%s190 + $0x38] sm:$0xff] %v527
        %560 = vst [vmem:[%s190 + $0x40] sm:$0xff] %v528
        %561 = vst [vmem:[%s190 + $0x48] sm:$0xff] %v529
        %562 = vst [vmem:[%s190 + $0x50] sm:$0xff] %v530
        %563 = vst [vmem:[%s190 + $0x58] sm:$0xff] %v531
        %564 = vst [vmem:[%s190 + $0x60] sm:$0xff] %v532
        %565 = vst [vmem:[%s190 + $0x68] sm:$0xff] %v533
        %566 = vst [vmem:[%s190 + $0x70] sm:$0xff] %v534
        %567 = vst [vmem:[%s190 + $0x78] sm:$0xff] %v535
        %568 = vst [vmem:[%s190 + $0x80] sm:$0xff] %v536
        %569 = vst [vmem:[%s190 + $0x88] sm:$0xff] %v537
        %570 = vst [vmem:[%s190 + $0x90] sm:$0xff] %v538
        %571 = vst [vmem:[%s190 + $0x98] sm:$0xff] %v539
        %572 = vst [vmem:[%s190 + $0xa0] sm:$0xff] %v540
        %573 = vst [vmem:[%s190 + $0xa8] sm:$0xff] %v541
        %574 = vst [vmem:[%s190 + $0xb0] sm:$0xff] %v542
        %575 = vst [vmem:[%s190 + $0xb8] sm:$0xff] %v543
        %576 = vst [vmem:[%s190 + $0xc0] sm:$0xff] %v544
        %577 = vst [vmem:[%s190 + $0xc8] sm:$0xff] %v545
        %578 = vst [vmem:[%s190 + $0xd0] sm:$0xff] %v546
        %579 = vst [vmem:[%s190 + $0xd8] sm:$0xff] %v547
        %580 = vst [vmem:[%s190 + $0xe0] sm:$0xff] %v548
        %581 = vst [vmem:[%s190 + $0xe8] sm:$0xff] %v549
        %582 = vst [vmem:[%s190 + $0xf0] sm:$0xff] %v550
        %583 = vst [vmem:[%s190 + $0xf8] sm:$0xff] %v551
        %s584 = sand.u32 %s90, 1
        %s585 = sand.u32 %s90, 1
        %s586 = smul.addr %s585, 256
        %s587 = scalar_lea.vmem [#allocation3], %s586
        // Predicated region
        $region56: #{convt_forward.1} parent=50 // pred_check
          %p588 = pneg %p100
        $region57: #{convt_forward.1} parent=50 // pred_check_branch
          %590 = sbr.rel (%p588) target = $region59
        $region58: #{convt_forward.1} parent=50 // pred_region
          %s591 = smul.u32 2, %s14
          %s592 = smul.addr %s591, 8
          %s593 = scalar_lea.vmem %s3, %s592
          // Predicated region
          $region60: #{convt_forward.1} parent=58 // pred_check
            _
          $region61: #{convt_forward.1} parent=58 // pred_check_branch
            %595 = sbr.rel (0) target = $region63
          $region62: #{convt_forward.1} parent=58 // pred_region
            // Predicated region
            $region64: #{convt_forward.1} parent=62 // pred_check
              _
            $region65: #{convt_forward.1} parent=62 // pred_check_branch
              %597 = sbr.rel (0) target = $region67
            $region66: #{convt_forward.1} parent=62 // pred_region
              loop: start=0, step=1, limit=1
              $region68: #{convt_forward.1} parent=66 // loop_pre_header
                _
              $region69: #{convt_forward.1} parent=66 // loop_header
                %s599 = sphi 0, %s603
                %p600 = scmp.ge.s32.totalorder %s599, 1
                %s604 = sphi %s587, %s587
                %s605 = sphi %s593, %s593
              $region70: #{convt_forward.1} parent=66 // loop_header_branch
                %602 = sbr.rel (%p600) target = $region74
              $region71: #{convt_forward.1} parent=66 // loop_body
                %v606 = vld [vmem:[%s604] sm:$0xff]
                %607 = vst [vmem:[%s605] sm:$0xff] %v606
                %v608 = vld [vmem:[%s604 + $0x8] sm:$0xff]
                %609 = vst [vmem:[%s605 + $0x8] sm:$0xff] %v608
                %v610 = vld [vmem:[%s604 + $0x10] sm:$0xff]
                %611 = vst [vmem:[%s605 + $0x20] sm:$0xff] %v610
                %v612 = vld [vmem:[%s604 + $0x18] sm:$0xff]
                %613 = vst [vmem:[%s605 + $0x28] sm:$0xff] %v612
                %v614 = vld [vmem:[%s604 + $0x20] sm:$0xff]
                %615 = vst [vmem:[%s605 + $0x40] sm:$0xff] %v614
                %v616 = vld [vmem:[%s604 + $0x28] sm:$0xff]
                %617 = vst [vmem:[%s605 + $0x48] sm:$0xff] %v616
                %v618 = vld [vmem:[%s604 + $0x30] sm:$0xff]
                %619 = vst [vmem:[%s605 + $0x60] sm:$0xff] %v618
                %v620 = vld [vmem:[%s604 + $0x38] sm:$0xff]
                %621 = vst [vmem:[%s605 + $0x68] sm:$0xff] %v620
                %v622 = vld [vmem:[%s604 + $0x40] sm:$0xff]
                %623 = vst [vmem:[%s605 + $0x80] sm:$0xff] %v622
                %v624 = vld [vmem:[%s604 + $0x48] sm:$0xff]
                %625 = vst [vmem:[%s605 + $0x88] sm:$0xff] %v624
                %v626 = vld [vmem:[%s604 + $0x50] sm:$0xff]
                %627 = vst [vmem:[%s605 + $0xa0] sm:$0xff] %v626
                %v628 = vld [vmem:[%s604 + $0x58] sm:$0xff]
                %629 = vst [vmem:[%s605 + $0xa8] sm:$0xff] %v628
                %v630 = vld [vmem:[%s604 + $0x60] sm:$0xff]
                %631 = vst [vmem:[%s605 + $0xc0] sm:$0xff] %v630
                %v632 = vld [vmem:[%s604 + $0x68] sm:$0xff]
                %633 = vst [vmem:[%s605 + $0xc8] sm:$0xff] %v632
                %v634 = vld [vmem:[%s604 + $0x70] sm:$0xff]
                %635 = vst [vmem:[%s605 + $0xe0] sm:$0xff] %v634
                %v636 = vld [vmem:[%s604 + $0x78] sm:$0xff]
                %637 = vst [vmem:[%s605 + $0xe8] sm:$0xff] %v636
                %v638 = vld [vmem:[%s604 + $0x80] sm:$0xff]
                %639 = vst [vmem:[%s605 + $0x100] sm:$0xff] %v638
                %v640 = vld [vmem:[%s604 + $0x88] sm:$0xff]
                %641 = vst [vmem:[%s605 + $0x108] sm:$0xff] %v640
                %v642 = vld [vmem:[%s604 + $0x90] sm:$0xff]
                %643 = vst [vmem:[%s605 + $0x120] sm:$0xff] %v642
                %v644 = vld [vmem:[%s604 + $0x98] sm:$0xff]
                %645 = vst [vmem:[%s605 + $0x128] sm:$0xff] %v644
                %v646 = vld [vmem:[%s604 + $0xa0] sm:$0xff]
                %647 = vst [vmem:[%s605 + $0x140] sm:$0xff] %v646
                %v648 = vld [vmem:[%s604 + $0xa8] sm:$0xff]
                %649 = vst [vmem:[%s605 + $0x148] sm:$0xff] %v648
                %v650 = vld [vmem:[%s604 + $0xb0] sm:$0xff]
                %651 = vst [vmem:[%s605 + $0x160] sm:$0xff] %v650
                %v652 = vld [vmem:[%s604 + $0xb8] sm:$0xff]
                %653 = vst [vmem:[%s605 + $0x168] sm:$0xff] %v652
                %v654 = vld [vmem:[%s604 + $0xc0] sm:$0xff]
                %655 = vst [vmem:[%s605 + $0x180] sm:$0xff] %v654
                %v656 = vld [vmem:[%s604 + $0xc8] sm:$0xff]
                %657 = vst [vmem:[%s605 + $0x188] sm:$0xff] %v656
                %v658 = vld [vmem:[%s604 + $0xd0] sm:$0xff]
                %659 = vst [vmem:[%s605 + $0x1a0] sm:$0xff] %v658
                %v660 = vld [vmem:[%s604 + $0xd8] sm:$0xff]
                %661 = vst [vmem:[%s605 + $0x1a8] sm:$0xff] %v660
                %v662 = vld [vmem:[%s604 + $0xe0] sm:$0xff]
                %663 = vst [vmem:[%s605 + $0x1c0] sm:$0xff] %v662
                %v664 = vld [vmem:[%s604 + $0xe8] sm:$0xff]
                %665 = vst [vmem:[%s605 + $0x1c8] sm:$0xff] %v664
                %v666 = vld [vmem:[%s604 + $0xf0] sm:$0xff]
                %667 = vst [vmem:[%s605 + $0x1e0] sm:$0xff] %v666
                %v668 = vld [vmem:[%s604 + $0xf8] sm:$0xff]
                %669 = vst [vmem:[%s605 + $0x1e8] sm:$0xff] %v668
              $region72: #{convt_forward.1} parent=66 // loop_footer
                %s603 = sadd.s32 1, %s599
              $region73: #{convt_forward.1} parent=66 // loop_footer_branch
                %598 = sbr.rel target = $region69
              $region74: #{convt_forward.1} parent=66 // loop_exit
                _
            $region67: #{convt_forward.1} parent=62 // pred_fallthru
              _
            // Predicated region
            $region75: #{convt_forward.1} parent=62 // pred_check
              _
            $region76: #{convt_forward.1} parent=62 // pred_check_branch
              %671 = sbr.rel target = $region78
            $region77: #{convt_forward.1} parent=62 // pred_region
              _
            $region78: #{convt_forward.1} parent=62 // pred_fallthru
              _
          $region63: #{convt_forward.1} parent=58 // pred_fallthru
            _
          %672 = vnop
        $region59: #{convt_forward.1} parent=50 // pred_fallthru
          _
      $region51: #{convt_forward.1} parent=5 // pred_fallthru
        _
      %p673 = scmp.le.s32.totalorder 2, %s9
      // Predicated region
      $region79: #{convt_forward.1} parent=5 // pred_check
        %p674 = pneg %p673
      $region80: #{convt_forward.1} parent=5 // pred_check_branch
        %676 = sbr.rel (%p674) target = $region82
      $region81: #{convt_forward.1} parent=5 // pred_region
        %s677 = ssub.s32 %s9, 2
        // Predicated region
        $region83: #{convt_forward.1} parent=81 // pred_check
          %p678 = pneg %p106
        $region84: #{convt_forward.1} parent=81 // pred_check_branch
          %680 = sbr.rel (%p678) target = $region86
        $region85: #{convt_forward.1} parent=81 // pred_region
          %s681 = sand.u32 %s91, 1
          %s682 = sand.u32 %s91, 1
          %s683 = smul.addr %s682, 256
          %s684 = scalar_lea.vmem [#allocation3], %s683
        $region86: #{convt_forward.1} parent=81 // pred_fallthru
          _
      $region82: #{convt_forward.1} parent=5 // pred_fallthru
        _
    $region6: #{convt_forward.1} parent=1 // loop_footer
      %s13 = sadd.s32 1, %s9
    $region7: #{convt_forward.1} parent=1 // loop_footer_branch
      %8 = sbr.rel target = $region3
    $region8: #{convt_forward.1} parent=1 // loop_exit
      _

</llo_original>
